<compile_context>
chip_gen: v5e
topology: v5e:2x2
jax: 0.10.0
libtpu: 0.0.40
codegen_flags: <defaults>
</compile_context>

<pallas_src>
import math
import jax
import jax.numpy as jnp
from jax.experimental import pallas as pl
from jax.experimental.pallas import tpu as pltpu


def lstm_kernel(x_ref, h0_ref, c0_ref, w_ih_ref, w_hh_ref, b_ref,
                w_out_ref, b_out_ref,
                logp_ref, hT_ref, cT_ref,
                gx_scr, hhist_scr):
    """Single-layer LSTM + Linear + LogSoftmax, fully in-kernel.

    x_ref:     (T, I)        input sequence
    h0/c0:     (1, H)        initial hidden / cell state (lstm_layers == 1)
    w_ih_ref:  (I, 4H)       transposed weight_ih_l0 (gate order i, f, g, o)
    w_hh_ref:  (H, 4H)       transposed weight_hh_l0
    b_ref:     (1, 4H)       bias_ih_l0 + bias_hh_l0
    w_out_ref: (H, Opad)     transposed + lane-padded Linear weight
    b_out_ref: (1, Opad)     lane-padded Linear bias (pad cols = -1e30)
    logp_ref:  (T, Opad)     log-softmax output (padded; sliced outside)
    hT/cT:     (1, H)        final hidden / cell state
    gx_scr:    (T, 4H)       precomputed x-side gate pre-activations
    hhist_scr: (T, H)        hidden-state history for the batched output head
    """
    T = x_ref.shape[0]
    H = h0_ref.shape[1]

    # Hoisted input-side matmul + bias: one (T,I)x(I,4H) matmul for the whole
    # sequence instead of T degenerate (1,I) matmuls inside the recurrence.
    gx_scr[...] = (
        jnp.dot(x_ref[...], w_ih_ref[...], preferred_element_type=jnp.float32)
        + b_ref[...]
    )

    def step(t, carry):
        h, c = carry                                               # (1, H) each
        # Only the recurrent matmul remains on the serial critical path.
        gates = gx_scr[pl.ds(t, 1), :] + jnp.dot(
            h, w_hh_ref[...], preferred_element_type=jnp.float32
        )                                                           # (1, 4H)

        # One full-vreg sigmoid pass + one full-vreg tanh pass, then slice
        # (fewer EUP pushes than four per-gate sub-vreg transcendentals).
        sig = jax.nn.sigmoid(gates)
        th = jnp.tanh(gates)
        i_g = sig[:, 0 * H:1 * H]
        f_g = sig[:, 1 * H:2 * H]
        g_g = th[:, 2 * H:3 * H]
        o_g = sig[:, 3 * H:4 * H]

        c_new = f_g * c + i_g * g_g
        h_new = o_g * jnp.tanh(c_new)
        hhist_scr[pl.ds(t, 1), :] = h_new
        return (h_new, c_new)

    # Short fixed trip count -> fully unroll for LLO scheduling visibility.
    hT, cT = jax.lax.fori_loop(0, T, step, (h0_ref[...], c0_ref[...]),
                               unroll=True)
    hT_ref[...] = hT
    cT_ref[...] = cT

    # Batched output head: one (T,H)x(H,Opad) matmul + one batched log-softmax,
    # written as a single lane-dense (T, Opad) store.
    y = jnp.dot(hhist_scr[...], w_out_ref[...],
                preferred_element_type=jnp.float32) + b_out_ref[...]  # (T, Opad)
    m = jnp.max(y, axis=-1, keepdims=True)
    lse = m + jnp.log(jnp.sum(jnp.exp(y - m), axis=-1, keepdims=True))
    logp_ref[...] = (y - lse).astype(logp_ref.dtype)


def lstm_forward(x, h0, c0, params):
    """Wrapper: reshapes / pads params for the kernel and invokes pallas_call."""
    T, I = x.shape
    H = params["w_hh"].shape[1]
    O = params["w_out"].shape[0]
    OP = ((O + 127) // 128) * 128            # lane-dense padded output width

    # Glue: transpose weights, fold the two LSTM biases into one, pad the head.
    w_ih_t = params["w_ih"].T                        # (I, 4H)
    w_hh_t = params["w_hh"].T                        # (H, 4H)
    b = (params["b_ih"] + params["b_hh"]).reshape(1, 4 * H)
    w_out_pad = jnp.pad(params["w_out"].T, ((0, 0), (0, OP - O)))      # (H, OP)
    # Padded columns get bias -1e30 (and zero weights): their logits underflow
    # to 0 in the softmax sum, so log-softmax over OP == log-softmax over O.
    b_out_pad = jnp.pad(params["b_out"].reshape(1, O), ((0, 0), (0, OP - O)),
                        constant_values=-1e30)                          # (1, OP)

    vmem = pl.BlockSpec(memory_space=pltpu.MemorySpace.VMEM)
    logp_pad, hT, cT = pl.pallas_call(
        lstm_kernel,
        out_shape=(
            jax.ShapeDtypeStruct((T, OP), jnp.float32),
            jax.ShapeDtypeStruct((1, H), jnp.float32),
            jax.ShapeDtypeStruct((1, H), jnp.float32),
        ),
        in_specs=[vmem] * 8,
        out_specs=(vmem, vmem, vmem),
        scratch_shapes=[
            pltpu.VMEM((T, 4 * H), jnp.float32),   # precomputed x-side gates
            pltpu.VMEM((T, H), jnp.float32),       # hidden-state history
        ],
    )(x, h0, c0, w_ih_t, w_hh_t, b, w_out_pad, b_out_pad)
    return logp_pad[:, :O], (hT, cT)


def lstm_forward_ref(x, h0, c0, params):
    """Pure-JAX reference (mirrors torch nn.LSTM / Linear / LogSoftmax)."""
    H = params["w_hh"].shape[1]
    b = params["b_ih"] + params["b_hh"]

    def step(carry, x_t):
        h, c = carry
        g = x_t @ params["w_ih"].T + h @ params["w_hh"].T + b
        i = jax.nn.sigmoid(g[0 * H:1 * H])
        f = jax.nn.sigmoid(g[1 * H:2 * H])
        gg = jnp.tanh(g[2 * H:3 * H])
        o = jax.nn.sigmoid(g[3 * H:4 * H])
        c = f * c + i * gg
        h = o * jnp.tanh(c)
        return (h, c), h

    (hT, cT), hs = jax.lax.scan(step, (h0[0], c0[0]), x)
    y = hs @ params["w_out"].T + params["b_out"]
    logp = jax.nn.log_softmax(y, axis=1)
    return logp, (hT[None], cT[None])


if __name__ == "__main__":
    # Small shapes consistent with the module's forward.
    T, I, H, O = 8, 16, 32, 8          # seq, input_size, hidden_size, output_size
    LAYERS = 1                          # TODO(synk): lstm_layers > 1 not implemented

    key = jax.random.PRNGKey(0)
    ks = jax.random.split(key, 9)
    s = 1.0 / math.sqrt(H)              # PyTorch-style uniform init scale
    params = {
        "w_ih": jax.random.uniform(ks[0], (4 * H, I), jnp.float32, -s, s),
        "w_hh": jax.random.uniform(ks[1], (4 * H, H), jnp.float32, -s, s),
        "b_ih": jax.random.uniform(ks[2], (4 * H,), jnp.float32, -s, s),
        "b_hh": jax.random.uniform(ks[3], (4 * H,), jnp.float32, -s, s),
        "w_out": jax.random.uniform(ks[4], (O, H), jnp.float32, -s, s),
        "b_out": jax.random.uniform(ks[5], (O,), jnp.float32, -s, s),
    }

    x = jax.random.normal(ks[6], (T, I), jnp.float32)
    h0 = jax.random.normal(ks[7], (LAYERS, H), jnp.float32)
    c0 = jax.random.normal(ks[8], (LAYERS, H), jnp.float32)

    logp, (hT, cT) = lstm_forward(x, h0, c0, params)
    jax.block_until_ready((logp, hT, cT))

    # Correctness check against the pure-JAX reference.
    logp_r, (hT_r, cT_r) = lstm_forward_ref(x, h0, c0, params)
    assert jnp.allclose(logp, logp_r, atol=2e-3), "logp mismatch"
    assert jnp.allclose(hT, hT_r, atol=2e-3), "hT mismatch"
    assert jnp.allclose(cT, cT_r, atol=2e-3), "cT mismatch"

    print("KERNEL_OK")
</pallas_src>

<mosaic_0001>
module attributes {stable_mosaic.version = 11 : i64} {
  func.func @lstm_kernel(%arg0: memref<8x16xf32, #tpu.memory_space<vmem>>, %arg1: memref<1x32xf32, #tpu.memory_space<vmem>>, %arg2: memref<1x32xf32, #tpu.memory_space<vmem>>, %arg3: memref<16x128xf32, #tpu.memory_space<vmem>>, %arg4: memref<32x128xf32, #tpu.memory_space<vmem>>, %arg5: memref<1x128xf32, #tpu.memory_space<vmem>>, %arg6: memref<32x128xf32, #tpu.memory_space<vmem>>, %arg7: memref<1x128xf32, #tpu.memory_space<vmem>>, %arg8: memref<8x128xf32, #tpu.memory_space<vmem>>, %arg9: memref<1x32xf32, #tpu.memory_space<vmem>>, %arg10: memref<1x32xf32, #tpu.memory_space<vmem>>, %arg11: memref<8x128xf32, #tpu.memory_space<vmem>>, %arg12: memref<8x32xf32, #tpu.memory_space<vmem>>) attributes {dimension_semantics = [], scalar_prefetch = 0 : i64, scratch_operands = 2 : i64, tpu.core_type = #tpu.core_type<tc>} {
    %c0 = arith.constant 0 : index
    %c0_0 = arith.constant 0 : index
    %0 = vector.load %arg0[%c0, %c0_0] : memref<8x16xf32, #tpu.memory_space<vmem>>, vector<8x16xf32>
    %c0_1 = arith.constant 0 : index
    %c0_2 = arith.constant 0 : index
    %1 = vector.load %arg3[%c0_1, %c0_2] : memref<16x128xf32, #tpu.memory_space<vmem>>, vector<16x128xf32>
    %cst = arith.constant dense<0.000000e+00> : vector<8x128xf32>
    %2 = tpu.matmul %0, %1, %cst {dimension_numbers = #tpu.dot_dimension_numbers<[1], [0], [0], [1], [0, 0, 1, 1], [], []>} : vector<8x16xf32>, vector<16x128xf32>, vector<8x128xf32> -> vector<8x128xf32>
    %c0_3 = arith.constant 0 : index
    %c0_4 = arith.constant 0 : index
    %3 = vector.load %arg5[%c0_3, %c0_4] : memref<1x128xf32, #tpu.memory_space<vmem>>, vector<1x128xf32>
    %4 = vector.broadcast %3 : vector<1x128xf32> to vector<8x128xf32>
    %5 = arith.addf %2, %4 : vector<8x128xf32>
    %c0_5 = arith.constant 0 : index
    %c0_6 = arith.constant 0 : index
    %6 = vector.load %arg11[%c0_5, %c0_6] : memref<8x128xf32, #tpu.memory_space<vmem>>, vector<8x128xf32>
    tpu.vector_store %arg11[%c0_5, %c0_6], %5 {strides = array<i32>} : memref<8x128xf32, #tpu.memory_space<vmem>>, vector<8x128xf32>,
    %c0_7 = arith.constant 0 : index
    %c0_8 = arith.constant 0 : index
    %7 = vector.load %arg1[%c0_7, %c0_8] : memref<1x32xf32, #tpu.memory_space<vmem>>, vector<1x32xf32>
    %c0_9 = arith.constant 0 : index
    %c0_10 = arith.constant 0 : index
    %8 = vector.load %arg2[%c0_9, %c0_10] : memref<1x32xf32, #tpu.memory_space<vmem>>, vector<1x32xf32>
    %c0_i32 = arith.constant 0 : i32
    %9 = arith.index_cast %c0_i32 : i32 to index
    %c0_11 = arith.constant 0 : index
    %10 = vector.load %arg11[%9, %c0_11] : memref<8x128xf32, #tpu.memory_space<vmem>>, vector<1x128xf32>
    %c0_12 = arith.constant 0 : index
    %c0_13 = arith.constant 0 : index
    %11 = vector.load %arg4[%c0_12, %c0_13] : memref<32x128xf32, #tpu.memory_space<vmem>>, vector<32x128xf32>
    %cst_14 = arith.constant dense<0.000000e+00> : vector<1x128xf32>
    %12 = tpu.matmul %7, %11, %cst_14 {dimension_numbers = #tpu.dot_dimension_numbers<[1], [0], [0], [1], [0, 0, 1, 1], [], []>} : vector<1x32xf32>, vector<32x128xf32>, vector<1x128xf32> -> vector<1x128xf32>
    %13 = arith.addf %10, %12 : vector<1x128xf32>
    %14 = arith.negf %13 : vector<1x128xf32>
    %15 = math.exp %14 : vector<1x128xf32>
    %cst_15 = arith.constant 1.000000e+00 : f32
    %16 = vector.broadcast %cst_15 : f32 to vector<1x128xf32>
    %17 = arith.addf %16, %15 : vector<1x128xf32>
    %18 = arith.divf %16, %17 : vector<1x128xf32>
    %19 = math.tanh %13 : vector<1x128xf32>
    %20 = vector.extract_strided_slice %18 {offsets = [0, 0], sizes = [1, 32], strides = [1, 1]} : vector<1x128xf32> to vector<1x32xf32>
    %21 = vector.extract_strided_slice %18 {offsets = [0, 32], sizes = [1, 32], strides = [1, 1]} : vector<1x128xf32> to vector<1x32xf32>
    %22 = vector.extract_strided_slice %19 {offsets = [0, 64], sizes = [1, 32], strides = [1, 1]} : vector<1x128xf32> to vector<1x32xf32>
    %23 = vector.extract_strided_slice %18 {offsets = [0, 96], sizes = [1, 32], strides = [1, 1]} : vector<1x128xf32> to vector<1x32xf32>
    %24 = arith.mulf %21, %8 : vector<1x32xf32>
    %25 = arith.mulf %20, %22 : vector<1x32xf32>
    %26 = arith.addf %24, %25 : vector<1x32xf32>
    %27 = math.tanh %26 : vector<1x32xf32>
    %28 = arith.mulf %23, %27 : vector<1x32xf32>
    %29 = arith.index_cast %c0_i32 : i32 to index
    %c0_16 = arith.constant 0 : index
    %30 = vector.load %arg12[%29, %c0_16] : memref<8x32xf32, #tpu.memory_space<vmem>>, vector<1x32xf32>
    tpu.vector_store %arg12[%29, %c0_16], %28 {strides = array<i32>} : memref<8x32xf32, #tpu.memory_space<vmem>>, vector<1x32xf32>,
    %c1_i32 = arith.constant 1 : i32
    %31 = arith.index_cast %c1_i32 : i32 to index
    %c0_17 = arith.constant 0 : index
    %32 = vector.load %arg11[%31, %c0_17] : memref<8x128xf32, #tpu.memory_space<vmem>>, vector<1x128xf32>
    %c0_18 = arith.constant 0 : index
    %c0_19 = arith.constant 0 : index
    %33 = vector.load %arg4[%c0_18, %c0_19] : memref<32x128xf32, #tpu.memory_space<vmem>>, vector<32x128xf32>
    %cst_20 = arith.constant dense<0.000000e+00> : vector<1x128xf32>
    %34 = tpu.matmul %28, %33, %cst_20 {dimension_numbers = #tpu.dot_dimension_numbers<[1], [0], [0], [1], [0, 0, 1, 1], [], []>} : vector<1x32xf32>, vector<32x128xf32>, vector<1x128xf32> -> vector<1x128xf32>
    %35 = arith.addf %32, %34 : vector<1x128xf32>
    %36 = arith.negf %35 : vector<1x128xf32>
    %37 = math.exp %36 : vector<1x128xf32>
    %cst_21 = arith.constant 1.000000e+00 : f32
    %38 = vector.broadcast %cst_21 : f32 to vector<1x128xf32>
    %39 = arith.addf %38, %37 : vector<1x128xf32>
    %40 = arith.divf %38, %39 : vector<1x128xf32>
    %41 = math.tanh %35 : vector<1x128xf32>
    %42 = vector.extract_strided_slice %40 {offsets = [0, 0], sizes = [1, 32], strides = [1, 1]} : vector<1x128xf32> to vector<1x32xf32>
    %43 = vector.extract_strided_slice %40 {offsets = [0, 32], sizes = [1, 32], strides = [1, 1]} : vector<1x128xf32> to vector<1x32xf32>
    %44 = vector.extract_strided_slice %41 {offsets = [0, 64], sizes = [1, 32], strides = [1, 1]} : vector<1x128xf32> to vector<1x32xf32>
    %45 = vector.extract_strided_slice %40 {offsets = [0, 96], sizes = [1, 32], strides = [1, 1]} : vector<1x128xf32> to vector<1x32xf32>
    %46 = arith.mulf %43, %26 : vector<1x32xf32>
    %47 = arith.mulf %42, %44 : vector<1x32xf32>
    %48 = arith.addf %46, %47 : vector<1x32xf32>
    %49 = math.tanh %48 : vector<1x32xf32>
    %50 = arith.mulf %45, %49 : vector<1x32xf32>
    %51 = arith.index_cast %c1_i32 : i32 to index
    %c0_22 = arith.constant 0 : index
    %52 = vector.load %arg12[%51, %c0_22] : memref<8x32xf32, #tpu.memory_space<vmem>>, vector<1x32xf32>
    tpu.vector_store %arg12[%51, %c0_22], %50 {strides = array<i32>} : memref<8x32xf32, #tpu.memory_space<vmem>>, vector<1x32xf32>,
    %c2_i32 = arith.constant 2 : i32
    %53 = arith.index_cast %c2_i32 : i32 to index
    %c0_23 = arith.constant 0 : index
    %54 = vector.load %arg11[%53, %c0_23] : memref<8x128xf32, #tpu.memory_space<vmem>>, vector<1x128xf32>
    %c0_24 = arith.constant 0 : index
    %c0_25 = arith.constant 0 : index
    %55 = vector.load %arg4[%c0_24, %c0_25] : memref<32x128xf32, #tpu.memory_space<vmem>>, vector<32x128xf32>
    %cst_26 = arith.constant dense<0.000000e+00> : vector<1x128xf32>
    %56 = tpu.matmul %50, %55, %cst_26 {dimension_numbers = #tpu.dot_dimension_numbers<[1], [0], [0], [1], [0, 0, 1, 1], [], []>} : vector<1x32xf32>, vector<32x128xf32>, vector<1x128xf32> -> vector<1x128xf32>
    %57 = arith.addf %54, %56 : vector<1x128xf32>
    %58 = arith.negf %57 : vector<1x128xf32>
    %59 = math.exp %58 : vector<1x128xf32>
    %cst_27 = arith.constant 1.000000e+00 : f32
    %60 = vector.broadcast %cst_27 : f32 to vector<1x128xf32>
    %61 = arith.addf %60, %59 : vector<1x128xf32>
    %62 = arith.divf %60, %61 : vector<1x128xf32>
    %63 = math.tanh %57 : vector<1x128xf32>
    %64 = vector.extract_strided_slice %62 {offsets = [0, 0], sizes = [1, 32], strides = [1, 1]} : vector<1x128xf32> to vector<1x32xf32>
    %65 = vector.extract_strided_slice %62 {offsets = [0, 32], sizes = [1, 32], strides = [1, 1]} : vector<1x128xf32> to vector<1x32xf32>
    %66 = vector.extract_strided_slice %63 {offsets = [0, 64], sizes = [1, 32], strides = [1, 1]} : vector<1x128xf32> to vector<1x32xf32>
    %67 = vector.extract_strided_slice %62 {offsets = [0, 96], sizes = [1, 32], strides = [1, 1]} : vector<1x128xf32> to vector<1x32xf32>
    %68 = arith.mulf %65, %48 : vector<1x32xf32>
    %69 = arith.mulf %64, %66 : vector<1x32xf32>
    %70 = arith.addf %68, %69 : vector<1x32xf32>
    %71 = math.tanh %70 : vector<1x32xf32>
    %72 = arith.mulf %67, %71 : vector<1x32xf32>
    %73 = arith.index_cast %c2_i32 : i32 to index
    %c0_28 = arith.constant 0 : index
    %74 = vector.load %arg12[%73, %c0_28] : memref<8x32xf32, #tpu.memory_space<vmem>>, vector<1x32xf32>
    tpu.vector_store %arg12[%73, %c0_28], %72 {strides = array<i32>} : memref<8x32xf32, #tpu.memory_space<vmem>>, vector<1x32xf32>,
    %c3_i32 = arith.constant 3 : i32
    %75 = arith.index_cast %c3_i32 : i32 to index
    %c0_29 = arith.constant 0 : index
    %76 = vector.load %arg11[%75, %c0_29] : memref<8x128xf32, #tpu.memory_space<vmem>>, vector<1x128xf32>
    %c0_30 = arith.constant 0 : index
    %c0_31 = arith.constant 0 : index
    %77 = vector.load %arg4[%c0_30, %c0_31] : memref<32x128xf32, #tpu.memory_space<vmem>>, vector<32x128xf32>
    %cst_32 = arith.constant dense<0.000000e+00> : vector<1x128xf32>
    %78 = tpu.matmul %72, %77, %cst_32 {dimension_numbers = #tpu.dot_dimension_numbers<[1], [0], [0], [1], [0, 0, 1, 1], [], []>} : vector<1x32xf32>, vector<32x128xf32>, vector<1x128xf32> -> vector<1x128xf32>
    %79 = arith.addf %76, %78 : vector<1x128xf32>
    %80 = arith.negf %79 : vector<1x128xf32>
    %81 = math.exp %80 : vector<1x128xf32>
    %cst_33 = arith.constant 1.000000e+00 : f32
    %82 = vector.broadcast %cst_33 : f32 to vector<1x128xf32>
    %83 = arith.addf %82, %81 : vector<1x128xf32>
    %84 = arith.divf %82, %83 : vector<1x128xf32>
    %85 = math.tanh %79 : vector<1x128xf32>
    %86 = vector.extract_strided_slice %84 {offsets = [0, 0], sizes = [1, 32], strides = [1, 1]} : vector<1x128xf32> to vector<1x32xf32>
    %87 = vector.extract_strided_slice %84 {offsets = [0, 32], sizes = [1, 32], strides = [1, 1]} : vector<1x128xf32> to vector<1x32xf32>
    %88 = vector.extract_strided_slice %85 {offsets = [0, 64], sizes = [1, 32], strides = [1, 1]} : vector<1x128xf32> to vector<1x32xf32>
    %89 = vector.extract_strided_slice %84 {offsets = [0, 96], sizes = [1, 32], strides = [1, 1]} : vector<1x128xf32> to vector<1x32xf32>
    %90 = arith.mulf %87, %70 : vector<1x32xf32>
    %91 = arith.mulf %86, %88 : vector<1x32xf32>
    %92 = arith.addf %90, %91 : vector<1x32xf32>
    %93 = math.tanh %92 : vector<1x32xf32>
    %94 = arith.mulf %89, %93 : vector<1x32xf32>
    %95 = arith.index_cast %c3_i32 : i32 to index
    %c0_34 = arith.constant 0 : index
    %96 = vector.load %arg12[%95, %c0_34] : memref<8x32xf32, #tpu.memory_space<vmem>>, vector<1x32xf32>
    tpu.vector_store %arg12[%95, %c0_34], %94 {strides = array<i32>} : memref<8x32xf32, #tpu.memory_space<vmem>>, vector<1x32xf32>,
    %c4_i32 = arith.constant 4 : i32
    %97 = arith.index_cast %c4_i32 : i32 to index
    %c0_35 = arith.constant 0 : index
    %98 = vector.load %arg11[%97, %c0_35] : memref<8x128xf32, #tpu.memory_space<vmem>>, vector<1x128xf32>
    %c0_36 = arith.constant 0 : index
    %c0_37 = arith.constant 0 : index
    %99 = vector.load %arg4[%c0_36, %c0_37] : memref<32x128xf32, #tpu.memory_space<vmem>>, vector<32x128xf32>
    %cst_38 = arith.constant dense<0.000000e+00> : vector<1x128xf32>
    %100 = tpu.matmul %94, %99, %cst_38 {dimension_numbers = #tpu.dot_dimension_numbers<[1], [0], [0], [1], [0, 0, 1, 1], [], []>} : vector<1x32xf32>, vector<32x128xf32>, vector<1x128xf32> -> vector<1x128xf32>
    %101 = arith.addf %98, %100 : vector<1x128xf32>
    %102 = arith.negf %101 : vector<1x128xf32>
    %103 = math.exp %102 : vector<1x128xf32>
    %cst_39 = arith.constant 1.000000e+00 : f32
    %104 = vector.broadcast %cst_39 : f32 to vector<1x128xf32>
    %105 = arith.addf %104, %103 : vector<1x128xf32>
    %106 = arith.divf %104, %105 : vector<1x128xf32>
    %107 = math.tanh %101 : vector<1x128xf32>
    %108 = vector.extract_strided_slice %106 {offsets = [0, 0], sizes = [1, 32], strides = [1, 1]} : vector<1x128xf32> to vector<1x32xf32>
    %109 = vector.extract_strided_slice %106 {offsets = [0, 32], sizes = [1, 32], strides = [1, 1]} : vector<1x128xf32> to vector<1x32xf32>
    %110 = vector.extract_strided_slice %107 {offsets = [0, 64], sizes = [1, 32], strides = [1, 1]} : vector<1x128xf32> to vector<1x32xf32>
    %111 = vector.extract_strided_slice %106 {offsets = [0, 96], sizes = [1, 32], strides = [1, 1]} : vector<1x128xf32> to vector<1x32xf32>
    %112 = arith.mulf %109, %92 : vector<1x32xf32>
    %113 = arith.mulf %108, %110 : vector<1x32xf32>
    %114 = arith.addf %112, %113 : vector<1x32xf32>
    %115 = math.tanh %114 : vector<1x32xf32>
    %116 = arith.mulf %111, %115 : vector<1x32xf32>
    %117 = arith.index_cast %c4_i32 : i32 to index
    %c0_40 = arith.constant 0 : index
    %118 = vector.load %arg12[%117, %c0_40] : memref<8x32xf32, #tpu.memory_space<vmem>>, vector<1x32xf32>
    tpu.vector_store %arg12[%117, %c0_40], %116 {strides = array<i32>} : memref<8x32xf32, #tpu.memory_space<vmem>>, vector<1x32xf32>,
    %c5_i32 = arith.constant 5 : i32
    %119 = arith.index_cast %c5_i32 : i32 to index
    %c0_41 = arith.constant 0 : index
    %120 = vector.load %arg11[%119, %c0_41] : memref<8x128xf32, #tpu.memory_space<vmem>>, vector<1x128xf32>
    %c0_42 = arith.constant 0 : index
    %c0_43 = arith.constant 0 : index
    %121 = vector.load %arg4[%c0_42, %c0_43] : memref<32x128xf32, #tpu.memory_space<vmem>>, vector<32x128xf32>
    %cst_44 = arith.constant dense<0.000000e+00> : vector<1x128xf32>
    %122 = tpu.matmul %116, %121, %cst_44 {dimension_numbers = #tpu.dot_dimension_numbers<[1], [0], [0], [1], [0, 0, 1, 1], [], []>} : vector<1x32xf32>, vector<32x128xf32>, vector<1x128xf32> -> vector<1x128xf32>
    %123 = arith.addf %120, %122 : vector<1x128xf32>
    %124 = arith.negf %123 : vector<1x128xf32>
    %125 = math.exp %124 : vector<1x128xf32>
    %cst_45 = arith.constant 1.000000e+00 : f32
    %126 = vector.broadcast %cst_45 : f32 to vector<1x128xf32>
    %127 = arith.addf %126, %125 : vector<1x128xf32>
    %128 = arith.divf %126, %127 : vector<1x128xf32>
    %129 = math.tanh %123 : vector<1x128xf32>
    %130 = vector.extract_strided_slice %128 {offsets = [0, 0], sizes = [1, 32], strides = [1, 1]} : vector<1x128xf32> to vector<1x32xf32>
    %131 = vector.extract_strided_slice %128 {offsets = [0, 32], sizes = [1, 32], strides = [1, 1]} : vector<1x128xf32> to vector<1x32xf32>
    %132 = vector.extract_strided_slice %129 {offsets = [0, 64], sizes = [1, 32], strides = [1, 1]} : vector<1x128xf32> to vector<1x32xf32>
    %133 = vector.extract_strided_slice %128 {offsets = [0, 96], sizes = [1, 32], strides = [1, 1]} : vector<1x128xf32> to vector<1x32xf32>
    %134 = arith.mulf %131, %114 : vector<1x32xf32>
    %135 = arith.mulf %130, %132 : vector<1x32xf32>
    %136 = arith.addf %134, %135 : vector<1x32xf32>
    %137 = math.tanh %136 : vector<1x32xf32>
    %138 = arith.mulf %133, %137 : vector<1x32xf32>
    %139 = arith.index_cast %c5_i32 : i32 to index
    %c0_46 = arith.constant 0 : index
    %140 = vector.load %arg12[%139, %c0_46] : memref<8x32xf32, #tpu.memory_space<vmem>>, vector<1x32xf32>
    tpu.vector_store %arg12[%139, %c0_46], %138 {strides = array<i32>} : memref<8x32xf32, #tpu.memory_space<vmem>>, vector<1x32xf32>,
    %c6_i32 = arith.constant 6 : i32
    %141 = arith.index_cast %c6_i32 : i32 to index
    %c0_47 = arith.constant 0 : index
    %142 = vector.load %arg11[%141, %c0_47] : memref<8x128xf32, #tpu.memory_space<vmem>>, vector<1x128xf32>
    %c0_48 = arith.constant 0 : index
    %c0_49 = arith.constant 0 : index
    %143 = vector.load %arg4[%c0_48, %c0_49] : memref<32x128xf32, #tpu.memory_space<vmem>>, vector<32x128xf32>
    %cst_50 = arith.constant dense<0.000000e+00> : vector<1x128xf32>
    %144 = tpu.matmul %138, %143, %cst_50 {dimension_numbers = #tpu.dot_dimension_numbers<[1], [0], [0], [1], [0, 0, 1, 1], [], []>} : vector<1x32xf32>, vector<32x128xf32>, vector<1x128xf32> -> vector<1x128xf32>
    %145 = arith.addf %142, %144 : vector<1x128xf32>
    %146 = arith.negf %145 : vector<1x128xf32>
    %147 = math.exp %146 : vector<1x128xf32>
    %cst_51 = arith.constant 1.000000e+00 : f32
    %148 = vector.broadcast %cst_51 : f32 to vector<1x128xf32>
    %149 = arith.addf %148, %147 : vector<1x128xf32>
    %150 = arith.divf %148, %149 : vector<1x128xf32>
    %151 = math.tanh %145 : vector<1x128xf32>
    %152 = vector.extract_strided_slice %150 {offsets = [0, 0], sizes = [1, 32], strides = [1, 1]} : vector<1x128xf32> to vector<1x32xf32>
    %153 = vector.extract_strided_slice %150 {offsets = [0, 32], sizes = [1, 32], strides = [1, 1]} : vector<1x128xf32> to vector<1x32xf32>
    %154 = vector.extract_strided_slice %151 {offsets = [0, 64], sizes = [1, 32], strides = [1, 1]} : vector<1x128xf32> to vector<1x32xf32>
    %155 = vector.extract_strided_slice %150 {offsets = [0, 96], sizes = [1, 32], strides = [1, 1]} : vector<1x128xf32> to vector<1x32xf32>
    %156 = arith.mulf %153, %136 : vector<1x32xf32>
    %157 = arith.mulf %152, %154 : vector<1x32xf32>
    %158 = arith.addf %156, %157 : vector<1x32xf32>
    %159 = math.tanh %158 : vector<1x32xf32>
    %160 = arith.mulf %155, %159 : vector<1x32xf32>
    %161 = arith.index_cast %c6_i32 : i32 to index
    %c0_52 = arith.constant 0 : index
    %162 = vector.load %arg12[%161, %c0_52] : memref<8x32xf32, #tpu.memory_space<vmem>>, vector<1x32xf32>
    tpu.vector_store %arg12[%161, %c0_52], %160 {strides = array<i32>} : memref<8x32xf32, #tpu.memory_space<vmem>>, vector<1x32xf32>,
    %c7_i32 = arith.constant 7 : i32
    %163 = arith.index_cast %c7_i32 : i32 to index
    %c0_53 = arith.constant 0 : index
    %164 = vector.load %arg11[%163, %c0_53] : memref<8x128xf32, #tpu.memory_space<vmem>>, vector<1x128xf32>
    %c0_54 = arith.constant 0 : index
    %c0_55 = arith.constant 0 : index
    %165 = vector.load %arg4[%c0_54, %c0_55] : memref<32x128xf32, #tpu.memory_space<vmem>>, vector<32x128xf32>
    %cst_56 = arith.constant dense<0.000000e+00> : vector<1x128xf32>
    %166 = tpu.matmul %160, %165, %cst_56 {dimension_numbers = #tpu.dot_dimension_numbers<[1], [0], [0], [1], [0, 0, 1, 1], [], []>} : vector<1x32xf32>, vector<32x128xf32>, vector<1x128xf32> -> vector<1x128xf32>
    %167 = arith.addf %164, %166 : vector<1x128xf32>
    %168 = arith.negf %167 : vector<1x128xf32>
    %169 = math.exp %168 : vector<1x128xf32>
    %cst_57 = arith.constant 1.000000e+00 : f32
    %170 = vector.broadcast %cst_57 : f32 to vector<1x128xf32>
    %171 = arith.addf %170, %169 : vector<1x128xf32>
    %172 = arith.divf %170, %171 : vector<1x128xf32>
    %173 = math.tanh %167 : vector<1x128xf32>
    %174 = vector.extract_strided_slice %172 {offsets = [0, 0], sizes = [1, 32], strides = [1, 1]} : vector<1x128xf32> to vector<1x32xf32>
    %175 = vector.extract_strided_slice %172 {offsets = [0, 32], sizes = [1, 32], strides = [1, 1]} : vector<1x128xf32> to vector<1x32xf32>
    %176 = vector.extract_strided_slice %173 {offsets = [0, 64], sizes = [1, 32], strides = [1, 1]} : vector<1x128xf32> to vector<1x32xf32>
    %177 = vector.extract_strided_slice %172 {offsets = [0, 96], sizes = [1, 32], strides = [1, 1]} : vector<1x128xf32> to vector<1x32xf32>
    %178 = arith.mulf %175, %158 : vector<1x32xf32>
    %179 = arith.mulf %174, %176 : vector<1x32xf32>
    %180 = arith.addf %178, %179 : vector<1x32xf32>
    %181 = math.tanh %180 : vector<1x32xf32>
    %182 = arith.mulf %177, %181 : vector<1x32xf32>
    %183 = arith.index_cast %c7_i32 : i32 to index
    %c0_58 = arith.constant 0 : index
    %184 = vector.load %arg12[%183, %c0_58] : memref<8x32xf32, #tpu.memory_space<vmem>>, vector<1x32xf32>
    tpu.vector_store %arg12[%183, %c0_58], %182 {strides = array<i32>} : memref<8x32xf32, #tpu.memory_space<vmem>>, vector<1x32xf32>,
    %c8_i32 = arith.constant 8 : i32
    %c0_59 = arith.constant 0 : index
    %c0_60 = arith.constant 0 : index
    %185 = vector.load %arg9[%c0_59, %c0_60] : memref<1x32xf32, #tpu.memory_space<vmem>>, vector<1x32xf32>
    tpu.vector_store %arg9[%c0_59, %c0_60], %182 {strides = array<i32>} : memref<1x32xf32, #tpu.memory_space<vmem>>, vector<1x32xf32>,
    %c0_61 = arith.constant 0 : index
    %c0_62 = arith.constant 0 : index
    %186 = vector.load %arg10[%c0_61, %c0_62] : memref<1x32xf32, #tpu.memory_space<vmem>>, vector<1x32xf32>
    tpu.vector_store %arg10[%c0_61, %c0_62], %180 {strides = array<i32>} : memref<1x32xf32, #tpu.memory_space<vmem>>, vector<1x32xf32>,
    %c0_63 = arith.constant 0 : index
    %c0_64 = arith.constant 0 : index
    %187 = vector.load %arg12[%c0_63, %c0_64] : memref<8x32xf32, #tpu.memory_space<vmem>>, vector<8x32xf32>
    %c0_65 = arith.constant 0 : index
    %c0_66 = arith.constant 0 : index
    %188 = vector.load %arg6[%c0_65, %c0_66] : memref<32x128xf32, #tpu.memory_space<vmem>>, vector<32x128xf32>
    %cst_67 = arith.constant dense<0.000000e+00> : vector<8x128xf32>
    %189 = tpu.matmul %187, %188, %cst_67 {dimension_numbers = #tpu.dot_dimension_numbers<[1], [0], [0], [1], [0, 0, 1, 1], [], []>} : vector<8x32xf32>, vector<32x128xf32>, vector<8x128xf32> -> vector<8x128xf32>
    %c0_68 = arith.constant 0 : index
    %c0_69 = arith.constant 0 : index
    %190 = vector.load %arg7[%c0_68, %c0_69] : memref<1x128xf32, #tpu.memory_space<vmem>>, vector<1x128xf32>
    %191 = vector.broadcast %190 : vector<1x128xf32> to vector<8x128xf32>
    %192 = arith.addf %189, %191 : vector<8x128xf32>
    %cst_70 = arith.constant dense<0xFF800000> : vector<8xf32>
    %193 = vector.multi_reduction <maximumf>, %192, %cst_70 [1] : vector<8x128xf32> to vector<8xf32>
    %194 = vector.shape_cast %193 : vector<8xf32> to vector<8x1xf32>
    %195 = vector.broadcast %194 : vector<8x1xf32> to vector<8x128xf32>
    %196 = arith.subf %192, %195 : vector<8x128xf32>
    %197 = math.exp %196 : vector<8x128xf32>
    %cst_71 = arith.constant dense<0.000000e+00> : vector<8xf32>
    %198 = vector.multi_reduction <add>, %197, %cst_71 [1] : vector<8x128xf32> to vector<8xf32>
    %199 = vector.shape_cast %198 : vector<8xf32> to vector<8x1xf32>
    %200 = math.log %199 : vector<8x1xf32>
    %201 = arith.addf %194, %200 : vector<8x1xf32>
    %202 = vector.broadcast %201 : vector<8x1xf32> to vector<8x128xf32>
    %203 = arith.subf %192, %202 : vector<8x128xf32>
    %c0_72 = arith.constant 0 : index
    %c0_73 = arith.constant 0 : index
    %204 = vector.load %arg8[%c0_72, %c0_73] : memref<8x128xf32, #tpu.memory_space<vmem>>, vector<8x128xf32>
    tpu.vector_store %arg8[%c0_72, %c0_73], %203 {strides = array<i32>} : memref<8x128xf32, #tpu.memory_space<vmem>>, vector<8x128xf32>,
    return
  }
}

</mosaic_0001>

<llo_original>
// kernel: tpu_custom_call.1
$region0: #{tpu_custom_call.1}
  #allocation0 [shape = 'u32[]', space=smem, size = 0x4, offset = 0x4, fixed_abs, tag = 'smem constant byte address 0x4 - core index']
  #allocation1 [shape = 'u32[72,128]{1,0:T(1,128)}', space=vmem, size = 0x9000, scoped, tag = 'internal scratch']
  #allocation2 [shape = 'f32[8,128]{1,0:T(8,128)}', space=vmem, size = 0x1000, scoped, tag = 'scratch operand']
  #allocation3 [shape = 'f32[8,32]{1,0:T(8,128)}', space=vmem, size = 0x1000, scoped, tag = 'scratch operand']
  %s0 = inlined_call_operand.hbm [shape: f32[8,16], index: 0, kind: input, shape index: {}]
  %s1 = inlined_call_operand.hbm [shape: f32[1,32], index: 1, kind: input, shape index: {}]
  %s2 = inlined_call_operand.vmem [shape: f32[1,32], index: 2, kind: input, shape index: {}]
  %s3 = inlined_call_operand.hbm [shape: f32[16,128], index: 3, kind: input, shape index: {}]
  %s4 = inlined_call_operand.hbm [shape: f32[32,128], index: 4, kind: input, shape index: {}]
  %s5 = inlined_call_operand.vmem [shape: f32[1,128], index: 5, kind: input, shape index: {}]
  %s6 = inlined_call_operand.hbm [shape: f32[32,128], index: 6, kind: input, shape index: {}]
  %s7 = inlined_call_operand.vmem [shape: f32[1,128], index: 7, kind: input, shape index: {}]
  %s8 = inlined_call_operand.hbm [shape: f32[8,128], index: 8, kind: output, shape index: {0}]
  %s9 = inlined_call_operand.hbm [shape: f32[1,32], index: 9, kind: output, shape index: {1}]
  %s10 = inlined_call_operand.hbm [shape: f32[1,32], index: 10, kind: output, shape index: {2}]
  %11 = xla_tuple %s8, %s9, %s10
  %s12 = sld [smem:[#allocation0]]
  $region78: #{tpu_custom_call.1} parent=0
    _
  %s14 = ssub.s32 1, %s12
  %s15 = scalar_select 0, %s14, %s12
  $region1: #{tpu_custom_call.1} parent=0
    #allocation4 [shape = 'u8[4096]{0}', space=vmem, size = 0x1000, scoped, tag = 'input window, operand 0, single buffered']
    #allocation5 [shape = 's32[1]{0}', space=sflag, size = 0x4, scoped, tag = 'scoped memory for tpu_custom_call.1']
    #allocation6 [shape = 's32[1]{0}', space=sflag, size = 0x4, scoped, tag = 'scoped memory for tpu_custom_call.1']
    #allocation7 [shape = 'u8[512]{0}', space=vmem, size = 0x400, scoped, tag = 'input window, operand 1, single buffered']
    #allocation8 [shape = 's32[1]{0}', space=sflag, size = 0x4, scoped, tag = 'scoped memory for tpu_custom_call.1']
    #allocation9 [shape = 'u8[8192]{0}', space=vmem, size = 0x2000, scoped, tag = 'input window, operand 3, single buffered']
    #allocation10 [shape = 'u8[16384]{0}', space=vmem, size = 0x4000, scoped, tag = 'input window, operand 4, single buffered']
    #allocation11 [shape = 's32[1]{0}', space=sflag, size = 0x4, scoped, tag = 'scoped memory for tpu_custom_call.1']
    #allocation12 [shape = 'u8[16384]{0}', space=vmem, size = 0x4000, scoped, tag = 'input window, operand 6, single buffered']
    #allocation13 [shape = 'u8[4096]{0}', space=vmem, size = 0x1000, scoped, tag = 'output window, operand 0, single buffered']
    #allocation14 [shape = 'u8[512]{0}', space=vmem, size = 0x400, scoped, tag = 'output window, operand 1, single buffered']
    #allocation15 [shape = 's32[1]{0}', space=sflag, size = 0x4, scoped, tag = 'scoped memory for tpu_custom_call.1']
    #allocation16 [shape = 'u8[512]{0}', space=vmem, size = 0x400, scoped, tag = 'output window, operand 2, single buffered']
    %16 = vsyncpa [#allocation5], 0
    %17 = vsyncpa [#allocation8], 0
    %18 = vsyncpa [#allocation11], 0
    %19 = vsyncpa [#allocation6], 0
    %20 = vsyncpa [#allocation15], 0
    // Predicated region
    $region2: #{tpu_custom_call.1} parent=1 // pred_check
      _
    $region3: #{tpu_custom_call.1} parent=1 // pred_check_branch
      %22 = sbr.rel (0) target = $region5
    $region4: #{tpu_custom_call.1} parent=1 // pred_region
      %24 = vsyncadd [#allocation5], 0
      %s26 = sshll.u32 %s0, 4
      %s27 = int_to_ptr.hbm [resolvable:$true] %s26
      %s28 = sshll.u32 [#allocation4], 4
      %s29 = int_to_ptr.vmem [resolvable:$true] %s28
      %31 = dma.hbm_to_vmem [thread:$0]  %s27, 128, %s29, [#allocation5]
    $region5: #{tpu_custom_call.1} parent=1 // pred_fallthru
      _
    // Predicated region
    $region6: #{tpu_custom_call.1} parent=1 // pred_check
      _
    $region7: #{tpu_custom_call.1} parent=1 // pred_check_branch
      %33 = sbr.rel (0) target = $region9
    $region8: #{tpu_custom_call.1} parent=1 // pred_region
      %35 = vsyncadd [#allocation8], 0
      %s37 = sshll.u32 %s1, 4
      %s38 = int_to_ptr.hbm [resolvable:$true] %s37
      %s39 = sshll.u32 [#allocation7], 4
      %s40 = int_to_ptr.vmem [resolvable:$true] %s39
      %42 = dma.hbm_to_vmem [thread:$0]  %s38, 16, %s40, [#allocation8]
    $region9: #{tpu_custom_call.1} parent=1 // pred_fallthru
      _
    // Predicated region
    $region10: #{tpu_custom_call.1} parent=1 // pred_check
      _
    $region11: #{tpu_custom_call.1} parent=1 // pred_check_branch
      %44 = sbr.rel (0) target = $region13
    $region12: #{tpu_custom_call.1} parent=1 // pred_region
      _
    $region13: #{tpu_custom_call.1} parent=1 // pred_fallthru
      _
    // Predicated region
    $region14: #{tpu_custom_call.1} parent=1 // pred_check
      _
    $region15: #{tpu_custom_call.1} parent=1 // pred_check_branch
      %46 = sbr.rel (0) target = $region17
    $region16: #{tpu_custom_call.1} parent=1 // pred_region
      %48 = vsyncadd [#allocation8], 0
      %s49 = sshll.u32 %s3, 4
      %s50 = int_to_ptr.hbm [resolvable:$true] %s49
      %s51 = sshll.u32 [#allocation9], 4
      %s52 = int_to_ptr.vmem [resolvable:$true] %s51
      %57 = dma.hbm_to_vmem [thread:$0]  %s50, 256, %s52, [#allocation8], 128, 128, 8
    $region17: #{tpu_custom_call.1} parent=1 // pred_fallthru
      _
    // Predicated region
    $region18: #{tpu_custom_call.1} parent=1 // pred_check
      _
    $region19: #{tpu_custom_call.1} parent=1 // pred_check_branch
      %59 = sbr.rel (0) target = $region21
    $region20: #{tpu_custom_call.1} parent=1 // pred_region
      %61 = vsyncadd [#allocation11], 0
      %s62 = sshll.u32 %s4, 4
      %s63 = int_to_ptr.hbm [resolvable:$true] %s62
      %s64 = sshll.u32 [#allocation10], 4
      %s65 = int_to_ptr.vmem [resolvable:$true] %s64
      %70 = dma.hbm_to_vmem [thread:$0]  %s63, 512, %s65, [#allocation11], 128, 128, 8
    $region21: #{tpu_custom_call.1} parent=1 // pred_fallthru
      _
    // Predicated region
    $region22: #{tpu_custom_call.1} parent=1 // pred_check
      _
    $region23: #{tpu_custom_call.1} parent=1 // pred_check_branch
      %72 = sbr.rel (0) target = $region25
    $region24: #{tpu_custom_call.1} parent=1 // pred_region
      _
    $region25: #{tpu_custom_call.1} parent=1 // pred_fallthru
      _
    // Predicated region
    $region26: #{tpu_custom_call.1} parent=1 // pred_check
      _
    $region27: #{tpu_custom_call.1} parent=1 // pred_check_branch
      %74 = sbr.rel (0) target = $region29
    $region28: #{tpu_custom_call.1} parent=1 // pred_region
      %76 = vsyncadd [#allocation11], 0
      %s77 = sshll.u32 %s6, 4
      %s78 = int_to_ptr.hbm [resolvable:$true] %s77
      %s79 = sshll.u32 [#allocation12], 4
      %s80 = int_to_ptr.vmem [resolvable:$true] %s79
      %85 = dma.hbm_to_vmem [thread:$0]  %s78, 512, %s80, [#allocation11], 128, 128, 8
    $region29: #{tpu_custom_call.1} parent=1 // pred_fallthru
      _
    // Predicated region
    $region30: #{tpu_custom_call.1} parent=1 // pred_check
      _
    $region31: #{tpu_custom_call.1} parent=1 // pred_check_branch
      %87 = sbr.rel (0) target = $region33
    $region32: #{tpu_custom_call.1} parent=1 // pred_region
      _
    $region33: #{tpu_custom_call.1} parent=1 // pred_fallthru
      _
    // Predicated region
    $region34: #{tpu_custom_call.1} parent=1 // pred_check
      _
    $region35: #{tpu_custom_call.1} parent=1 // pred_check_branch
      %89 = sbr.rel (0) target = $region37
    $region36: #{tpu_custom_call.1} parent=1 // pred_region
      %91 = dma.done [#allocation5], 128
    $region37: #{tpu_custom_call.1} parent=1 // pred_fallthru
      _
    // Predicated region
    $region38: #{tpu_custom_call.1} parent=1 // pred_check
      _
    $region39: #{tpu_custom_call.1} parent=1 // pred_check_branch
      %93 = sbr.rel (0) target = $region41
    $region40: #{tpu_custom_call.1} parent=1 // pred_region
      %95 = dma.done [#allocation8], 16
    $region41: #{tpu_custom_call.1} parent=1 // pred_fallthru
      _
    // Predicated region
    $region42: #{tpu_custom_call.1} parent=1 // pred_check
      _
    $region43: #{tpu_custom_call.1} parent=1 // pred_check_branch
      %97 = sbr.rel (0) target = $region45
    $region44: #{tpu_custom_call.1} parent=1 // pred_region
      %99 = dma.done [#allocation8], 256
    $region45: #{tpu_custom_call.1} parent=1 // pred_fallthru
      _
    // Predicated region
    $region46: #{tpu_custom_call.1} parent=1 // pred_check
      _
    $region47: #{tpu_custom_call.1} parent=1 // pred_check_branch
      %101 = sbr.rel (0) target = $region49
    $region48: #{tpu_custom_call.1} parent=1 // pred_region
      %103 = dma.done [#allocation11], 512
    $region49: #{tpu_custom_call.1} parent=1 // pred_fallthru
      _
    // Predicated region
    $region50: #{tpu_custom_call.1} parent=1 // pred_check
      _
    $region51: #{tpu_custom_call.1} parent=1 // pred_check_branch
      %105 = sbr.rel (0) target = $region53
    $region52: #{tpu_custom_call.1} parent=1 // pred_region
      %107 = dma.done [#allocation11], 512
    $region53: #{tpu_custom_call.1} parent=1 // pred_fallthru
      _
    %v108 = vld [vmem:[#allocation4] sm:$0xff]
    %v109 = vld [vmem:[#allocation9] sm:$0xff]
    %v110 = vld [vmem:[#allocation9 + $0x8] sm:$0xff]
    %v111 = vld [vmem:[%s5] sm:$0x1]
    %v113 = vperm.slane %v111, 0
    %vm115 = vcmask 130048
    %v117 = vsel %vm115, %v108, 0
    %119 = vmatpush.msra.mxu0 0.0
    %120 = vmatpush.msra.mxu0 0.0
    %121 = vmatpush.msra.mxu0 0.0
    %122 = vmatpush.msra.mxu0 0.0
    %123 = vmatpush.msra.mxu0 0.0
    %124 = vmatpush.msra.mxu0 0.0
    %125 = vmatpush.msra.mxu0 0.0
    %126 = vmatpush.msra.mxu0 0.0
    %127 = vmatpush.msra.mxu0 0.0
    %128 = vmatpush.msra.mxu0 0.0
    %129 = vmatpush.msra.mxu0 0.0
    %130 = vmatpush.msra.mxu0 0.0
    %131 = vmatpush.msra.mxu0 0.0
    %132 = vmatpush.msra.mxu0 0.0
    %133 = vmatpush.msra.mxu0 %v110
    %134 = vmatpush.msra.mxu0 %v109
    %135 = vmatmul.f32.gmra.mxu0 %v117
    %v136 = vpop.f32.mrf.mxu0
    %v137 = vadd.f32 %v113, %v136
    %138 = vdwg.mxu0
    %139 = vst [vmem:[#allocation2] sm:$0xff] %v137
    %v140 = vld [vmem:[#allocation7] sm:$0x1]
    %v141 = vld [vmem:[%s2] sm:$0x1]
    %v142 = vld [vmem:[#allocation2] sm:$0x1]
    %v143 = vld [vmem:[#allocation10] sm:$0xff]
    %v144 = vld [vmem:[#allocation10 + $0x8] sm:$0xff]
    %v145 = vld [vmem:[#allocation10 + $0x10] sm:$0xff]
    %v146 = vld [vmem:[#allocation10 + $0x18] sm:$0xff]
    %vm147 = vcmask 261120
    %v149 = vsel %vm147, %v140, 0
    %151 = vmatpush.msra.mxu0 0.0
    %152 = vmatpush.msra.mxu0 0.0
    %153 = vmatpush.msra.mxu0 0.0
    %154 = vmatpush.msra.mxu0 0.0
    %155 = vmatpush.msra.mxu0 0.0
    %156 = vmatpush.msra.mxu0 0.0
    %157 = vmatpush.msra.mxu0 0.0
    %158 = vmatpush.msra.mxu0 0.0
    %159 = vmatpush.msra.mxu0 0.0
    %160 = vmatpush.msra.mxu0 0.0
    %161 = vmatpush.msra.mxu0 0.0
    %162 = vmatpush.msra.mxu0 0.0
    %163 = vmatpush.msra.mxu0 %v146
    %164 = vmatpush.msra.mxu0 %v145
    %165 = vmatpush.msra.mxu0 %v144
    %166 = vmatpush.msra.mxu0 %v143
    %167 = vmatmul.f32.gmra.mxu0 %v149
    %v168 = vpop.f32.mrf.mxu0
    %v169 = vadd.f32 0.0, %v168
    %170 = vdwg.mxu0
    %v171 = vadd.f32 %v142, %v169
    %v172 = vxor.u32 %v171, 2147483648
    %v173 = vmul.f32 %v172, 1.442695
    %v174 = vpow.pop %v173
    %v175 = vadd.f32 %v174, 1.0
    %v176 = vrcp.pop %v175
    %v177 = vmul.f32 %v175, %v176
    %v178 = vsub.f32 1.0, %v177
    %v179 = vmul.f32 %v176, %v178
    %v180 = vadd.f32 %v176, %v179
    %vm181 = vweird.f32 %v175
    %vm182 = vweird.f32 %v176
    %vm183 = vmor %vm181, %vm182
    %v184 = vsel %vm183, %v176, %v180
    %v185 = vand.u32 2147483647, %v175
    %vm186 = vcmp.eq.f32.partialorder %v185, 8.507059e+37
    %v187 = vand.u32 %v175, 2147483648
    %v188 = vor.u32 1.1754944e-38, %v187
    %v189 = vsel %vm186, %v188, %v184
    %v190 = vmul.f32 1.0, %v189
    %v191 = vtanh.pop %v171
    %v193 = vperm.slane %v141, 0
    %194 = vrot.lane.b32.xlu0 %v193, 32
    %v195 = vpop.permute.xlu0 %194
    %v197 = vmul.f32 %v190, %v195
    %199 = vrot.lane.b32.xlu0 %v191, 64
    %v200 = vpop.permute.xlu0 %199
    %v202 = vmul.f32 %v190, %v200
    %204 = vrot.lane.b32.xlu0 %v202, 32
    %v205 = vpop.permute.xlu0 %204
    %v207 = vadd.f32 %v197, %v205
    %v208 = vtanh.pop %v207
    %210 = vrot.lane.b32.xlu0 %v208, 64
    %v211 = vpop.permute.xlu0 %210
    %v213 = vmul.f32 %v190, %v211
    %215 = vrot.lane.b32.xlu0 %v213, 32
    %v216 = vpop.permute.xlu0 %215
    %vm218 = vcmask 253952
    %219 = vst.msk [vmem:[#allocation3] sm:$0x1] %vm218, %v216
    %v220 = vld [vmem:[#allocation2 + $0x1] sm:$0x1]
    %v221 = vld [vmem:[#allocation10] sm:$0xff]
    %v222 = vld [vmem:[#allocation10 + $0x8] sm:$0xff]
    %v223 = vld [vmem:[#allocation10 + $0x10] sm:$0xff]
    %v224 = vld [vmem:[#allocation10 + $0x18] sm:$0xff]
    %v225 = vsel %vm147, %v216, 0
    %227 = vmatpush.msra.mxu0 0.0
    %228 = vmatpush.msra.mxu0 0.0
    %229 = vmatpush.msra.mxu0 0.0
    %230 = vmatpush.msra.mxu0 0.0
    %231 = vmatpush.msra.mxu0 0.0
    %232 = vmatpush.msra.mxu0 0.0
    %233 = vmatpush.msra.mxu0 0.0
    %234 = vmatpush.msra.mxu0 0.0
    %235 = vmatpush.msra.mxu0 0.0
    %236 = vmatpush.msra.mxu0 0.0
    %237 = vmatpush.msra.mxu0 0.0
    %238 = vmatpush.msra.mxu0 0.0
    %239 = vmatpush.msra.mxu0 %v224
    %240 = vmatpush.msra.mxu0 %v223
    %241 = vmatpush.msra.mxu0 %v222
    %242 = vmatpush.msra.mxu0 %v221
    %243 = vmatmul.f32.gmra.mxu0 %v225
    %v244 = vpop.f32.mrf.mxu0
    %v245 = vadd.f32 0.0, %v244
    %246 = vdwg.mxu0
    %v247 = vadd.f32 %v220, %v245
    %v248 = vxor.u32 %v247, 2147483648
    %v249 = vmul.f32 %v248, 1.442695
    %v250 = vpow.pop %v249
    %v251 = vadd.f32 %v250, 1.0
    %v252 = vrcp.pop %v251
    %v253 = vmul.f32 %v251, %v252
    %v254 = vsub.f32 1.0, %v253
    %v255 = vmul.f32 %v252, %v254
    %v256 = vadd.f32 %v252, %v255
    %vm257 = vweird.f32 %v251
    %vm258 = vweird.f32 %v252
    %vm259 = vmor %vm257, %vm258
    %v260 = vsel %vm259, %v252, %v256
    %v261 = vand.u32 2147483647, %v251
    %vm262 = vcmp.eq.f32.partialorder %v261, 8.507059e+37
    %v263 = vand.u32 %v251, 2147483648
    %v264 = vor.u32 1.1754944e-38, %v263
    %v265 = vsel %vm262, %v264, %v260
    %v266 = vmul.f32 1.0, %v265
    %v267 = vtanh.pop %v247
    %v268 = vmul.f32 %v266, %v207
    %270 = vrot.lane.b32.xlu0 %v267, 64
    %v271 = vpop.permute.xlu0 %270
    %v273 = vmul.f32 %v266, %v271
    %275 = vrot.lane.b32.xlu0 %v273, 32
    %v276 = vpop.permute.xlu0 %275
    %v278 = vadd.f32 %v268, %v276
    %v279 = vtanh.pop %v278
    %281 = vrot.lane.b32.xlu0 %v279, 64
    %v282 = vpop.permute.xlu0 %281
    %v284 = vmul.f32 %v266, %v282
    %286 = vrot.lane.b32.xlu0 %v284, 32
    %v287 = vpop.permute.xlu0 %286
    %289 = vst.msk [vmem:[#allocation3 + $0x1] sm:$0x1] %vm218, %v287
    %v290 = vld [vmem:[#allocation2 + $0x2] sm:$0x1]
    %v291 = vld [vmem:[#allocation10] sm:$0xff]
    %v292 = vld [vmem:[#allocation10 + $0x8] sm:$0xff]
    %v293 = vld [vmem:[#allocation10 + $0x10] sm:$0xff]
    %v294 = vld [vmem:[#allocation10 + $0x18] sm:$0xff]
    %v295 = vsel %vm147, %v287, 0
    %297 = vmatpush.msra.mxu0 0.0
    %298 = vmatpush.msra.mxu0 0.0
    %299 = vmatpush.msra.mxu0 0.0
    %300 = vmatpush.msra.mxu0 0.0
    %301 = vmatpush.msra.mxu0 0.0
    %302 = vmatpush.msra.mxu0 0.0
    %303 = vmatpush.msra.mxu0 0.0
    %304 = vmatpush.msra.mxu0 0.0
    %305 = vmatpush.msra.mxu0 0.0
    %306 = vmatpush.msra.mxu0 0.0
    %307 = vmatpush.msra.mxu0 0.0
    %308 = vmatpush.msra.mxu0 0.0
    %309 = vmatpush.msra.mxu0 %v294
    %310 = vmatpush.msra.mxu0 %v293
    %311 = vmatpush.msra.mxu0 %v292
    %312 = vmatpush.msra.mxu0 %v291
    %313 = vmatmul.f32.gmra.mxu0 %v295
    %v314 = vpop.f32.mrf.mxu0
    %v315 = vadd.f32 0.0, %v314
    %316 = vdwg.mxu0
    %v317 = vadd.f32 %v290, %v315
    %v318 = vxor.u32 %v317, 2147483648
    %v319 = vmul.f32 %v318, 1.442695
    %v320 = vpow.pop %v319
    %v321 = vadd.f32 %v320, 1.0
    %v322 = vrcp.pop %v321
    %v323 = vmul.f32 %v321, %v322
    %v324 = vsub.f32 1.0, %v323
    %v325 = vmul.f32 %v322, %v324
    %v326 = vadd.f32 %v322, %v325
    %vm327 = vweird.f32 %v321
    %vm328 = vweird.f32 %v322
    %vm329 = vmor %vm327, %vm328
    %v330 = vsel %vm329, %v322, %v326
    %v331 = vand.u32 2147483647, %v321
    %vm332 = vcmp.eq.f32.partialorder %v331, 8.507059e+37
    %v333 = vand.u32 %v321, 2147483648
    %v334 = vor.u32 1.1754944e-38, %v333
    %v335 = vsel %vm332, %v334, %v330
    %v336 = vmul.f32 1.0, %v335
    %v337 = vtanh.pop %v317
    %v338 = vmul.f32 %v336, %v278
    %340 = vrot.lane.b32.xlu0 %v337, 64
    %v341 = vpop.permute.xlu0 %340
    %v343 = vmul.f32 %v336, %v341
    %345 = vrot.lane.b32.xlu0 %v343, 32
    %v346 = vpop.permute.xlu0 %345
    %v348 = vadd.f32 %v338, %v346
    %v349 = vtanh.pop %v348
    %351 = vrot.lane.b32.xlu0 %v349, 64
    %v352 = vpop.permute.xlu0 %351
    %v354 = vmul.f32 %v336, %v352
    %356 = vrot.lane.b32.xlu0 %v354, 32
    %v357 = vpop.permute.xlu0 %356
    %359 = vst.msk [vmem:[#allocation3 + $0x2] sm:$0x1] %vm218, %v357
    %v360 = vld [vmem:[#allocation2 + $0x3] sm:$0x1]
    %v361 = vld [vmem:[#allocation10] sm:$0xff]
    %v362 = vld [vmem:[#allocation10 + $0x8] sm:$0xff]
    %v363 = vld [vmem:[#allocation10 + $0x10] sm:$0xff]
    %v364 = vld [vmem:[#allocation10 + $0x18] sm:$0xff]
    %v365 = vsel %vm147, %v357, 0
    %367 = vmatpush.msra.mxu0 0.0
    %368 = vmatpush.msra.mxu0 0.0
    %369 = vmatpush.msra.mxu0 0.0
    %370 = vmatpush.msra.mxu0 0.0
    %371 = vmatpush.msra.mxu0 0.0
    %372 = vmatpush.msra.mxu0 0.0
    %373 = vmatpush.msra.mxu0 0.0
    %374 = vmatpush.msra.mxu0 0.0
    %375 = vmatpush.msra.mxu0 0.0
    %376 = vmatpush.msra.mxu0 0.0
    %377 = vmatpush.msra.mxu0 0.0
    %378 = vmatpush.msra.mxu0 0.0
    %379 = vmatpush.msra.mxu0 %v364
    %380 = vmatpush.msra.mxu0 %v363
    %381 = vmatpush.msra.mxu0 %v362
    %382 = vmatpush.msra.mxu0 %v361
    %383 = vmatmul.f32.gmra.mxu0 %v365
    %v384 = vpop.f32.mrf.mxu0
    %v385 = vadd.f32 0.0, %v384
    %386 = vdwg.mxu0
    %v387 = vadd.f32 %v360, %v385
    %v388 = vxor.u32 %v387, 2147483648
    %v389 = vmul.f32 %v388, 1.442695
    %v390 = vpow.pop %v389
    %v391 = vadd.f32 %v390, 1.0
    %v392 = vrcp.pop %v391
    %v393 = vmul.f32 %v391, %v392
    %v394 = vsub.f32 1.0, %v393
    %v395 = vmul.f32 %v392, %v394
    %v396 = vadd.f32 %v392, %v395
    %vm397 = vweird.f32 %v391
    %vm398 = vweird.f32 %v392
    %vm399 = vmor %vm397, %vm398
    %v400 = vsel %vm399, %v392, %v396
    %v401 = vand.u32 2147483647, %v391
    %vm402 = vcmp.eq.f32.partialorder %v401, 8.507059e+37
    %v403 = vand.u32 %v391, 2147483648
    %v404 = vor.u32 1.1754944e-38, %v403
    %v405 = vsel %vm402, %v404, %v400
    %v406 = vmul.f32 1.0, %v405
    %v407 = vtanh.pop %v387
    %v408 = vmul.f32 %v406, %v348
    %410 = vrot.lane.b32.xlu0 %v407, 64
    %v411 = vpop.permute.xlu0 %410
    %v413 = vmul.f32 %v406, %v411
    %415 = vrot.lane.b32.xlu0 %v413, 32
    %v416 = vpop.permute.xlu0 %415
    %v418 = vadd.f32 %v408, %v416
    %v419 = vtanh.pop %v418
    %421 = vrot.lane.b32.xlu0 %v419, 64
    %v422 = vpop.permute.xlu0 %421
    %v424 = vmul.f32 %v406, %v422
    %426 = vrot.lane.b32.xlu0 %v424, 32
    %v427 = vpop.permute.xlu0 %426
    %429 = vst.msk [vmem:[#allocation3 + $0x3] sm:$0x1] %vm218, %v427
    %v430 = vld [vmem:[#allocation2 + $0x4] sm:$0x1]
    %v431 = vld [vmem:[#allocation10] sm:$0xff]
    %v432 = vld [vmem:[#allocation10 + $0x8] sm:$0xff]
    %v433 = vld [vmem:[#allocation10 + $0x10] sm:$0xff]
    %v434 = vld [vmem:[#allocation10 + $0x18] sm:$0xff]
    %v435 = vsel %vm147, %v427, 0
    %437 = vmatpush.msra.mxu0 0.0
    %438 = vmatpush.msra.mxu0 0.0
    %439 = vmatpush.msra.mxu0 0.0
    %440 = vmatpush.msra.mxu0 0.0
    %441 = vmatpush.msra.mxu0 0.0
    %442 = vmatpush.msra.mxu0 0.0
    %443 = vmatpush.msra.mxu0 0.0
    %444 = vmatpush.msra.mxu0 0.0
    %445 = vmatpush.msra.mxu0 0.0
    %446 = vmatpush.msra.mxu0 0.0
    %447 = vmatpush.msra.mxu0 0.0
    %448 = vmatpush.msra.mxu0 0.0
    %449 = vmatpush.msra.mxu0 %v434
    %450 = vmatpush.msra.mxu0 %v433
    %451 = vmatpush.msra.mxu0 %v432
    %452 = vmatpush.msra.mxu0 %v431
    %453 = vmatmul.f32.gmra.mxu0 %v435
    %v454 = vpop.f32.mrf.mxu0
    %v455 = vadd.f32 0.0, %v454
    %456 = vdwg.mxu0
    %v457 = vadd.f32 %v430, %v455
    %v458 = vxor.u32 %v457, 2147483648
    %v459 = vmul.f32 %v458, 1.442695
    %v460 = vpow.pop %v459
    %v461 = vadd.f32 %v460, 1.0
    %v462 = vrcp.pop %v461
    %v463 = vmul.f32 %v461, %v462
    %v464 = vsub.f32 1.0, %v463
    %v465 = vmul.f32 %v462, %v464
    %v466 = vadd.f32 %v462, %v465
    %vm467 = vweird.f32 %v461
    %vm468 = vweird.f32 %v462
    %vm469 = vmor %vm467, %vm468
    %v470 = vsel %vm469, %v462, %v466
    %v471 = vand.u32 2147483647, %v461
    %vm472 = vcmp.eq.f32.partialorder %v471, 8.507059e+37
    %v473 = vand.u32 %v461, 2147483648
    %v474 = vor.u32 1.1754944e-38, %v473
    %v475 = vsel %vm472, %v474, %v470
    %v476 = vmul.f32 1.0, %v475
    %v477 = vtanh.pop %v457
    %v478 = vmul.f32 %v476, %v418
    %480 = vrot.lane.b32.xlu0 %v477, 64
    %v481 = vpop.permute.xlu0 %480
    %v483 = vmul.f32 %v476, %v481
    %485 = vrot.lane.b32.xlu0 %v483, 32
    %v486 = vpop.permute.xlu0 %485
    %v488 = vadd.f32 %v478, %v486
    %v489 = vtanh.pop %v488
    %491 = vrot.lane.b32.xlu0 %v489, 64
    %v492 = vpop.permute.xlu0 %491
    %v494 = vmul.f32 %v476, %v492
    %496 = vrot.lane.b32.xlu0 %v494, 32
    %v497 = vpop.permute.xlu0 %496
    %499 = vst.msk [vmem:[#allocation3 + $0x4] sm:$0x1] %vm218, %v497
    %v500 = vld [vmem:[#allocation2 + $0x5] sm:$0x1]
    %v501 = vld [vmem:[#allocation10] sm:$0xff]
    %v502 = vld [vmem:[#allocation10 + $0x8] sm:$0xff]
    %v503 = vld [vmem:[#allocation10 + $0x10] sm:$0xff]
    %v504 = vld [vmem:[#allocation10 + $0x18] sm:$0xff]
    %v505 = vsel %vm147, %v497, 0
    %507 = vmatpush.msra.mxu0 0.0
    %508 = vmatpush.msra.mxu0 0.0
    %509 = vmatpush.msra.mxu0 0.0
    %510 = vmatpush.msra.mxu0 0.0
    %511 = vmatpush.msra.mxu0 0.0
    %512 = vmatpush.msra.mxu0 0.0
    %513 = vmatpush.msra.mxu0 0.0
    %514 = vmatpush.msra.mxu0 0.0
    %515 = vmatpush.msra.mxu0 0.0
    %516 = vmatpush.msra.mxu0 0.0
    %517 = vmatpush.msra.mxu0 0.0
    %518 = vmatpush.msra.mxu0 0.0
    %519 = vmatpush.msra.mxu0 %v504
    %520 = vmatpush.msra.mxu0 %v503
    %521 = vmatpush.msra.mxu0 %v502
    %522 = vmatpush.msra.mxu0 %v501
    %523 = vmatmul.f32.gmra.mxu0 %v505
    %v524 = vpop.f32.mrf.mxu0
    %v525 = vadd.f32 0.0, %v524
    %526 = vdwg.mxu0
    %v527 = vadd.f32 %v500, %v525
    %v528 = vxor.u32 %v527, 2147483648
    %v529 = vmul.f32 %v528, 1.442695
    %v530 = vpow.pop %v529
    %v531 = vadd.f32 %v530, 1.0
    %v532 = vrcp.pop %v531
    %v533 = vmul.f32 %v531, %v532
    %v534 = vsub.f32 1.0, %v533
    %v535 = vmul.f32 %v532, %v534
    %v536 = vadd.f32 %v532, %v535
    %vm537 = vweird.f32 %v531
    %vm538 = vweird.f32 %v532
    %vm539 = vmor %vm537, %vm538
    %v540 = vsel %vm539, %v532, %v536
    %v541 = vand.u32 2147483647, %v531
    %vm542 = vcmp.eq.f32.partialorder %v541, 8.507059e+37
    %v543 = vand.u32 %v531, 2147483648
    %v544 = vor.u32 1.1754944e-38, %v543
    %v545 = vsel %vm542, %v544, %v540
    %v546 = vmul.f32 1.0, %v545
    %v547 = vtanh.pop %v527
    %v548 = vmul.f32 %v546, %v488
    %550 = vrot.lane.b32.xlu0 %v547, 64
    %v551 = vpop.permute.xlu0 %550
    %v553 = vmul.f32 %v546, %v551
    %555 = vrot.lane.b32.xlu0 %v553, 32
    %v556 = vpop.permute.xlu0 %555
    %v558 = vadd.f32 %v548, %v556
    %v559 = vtanh.pop %v558
    %561 = vrot.lane.b32.xlu0 %v559, 64
    %v562 = vpop.permute.xlu0 %561
    %v564 = vmul.f32 %v546, %v562
    %566 = vrot.lane.b32.xlu0 %v564, 32
    %v567 = vpop.permute.xlu0 %566
    %569 = vst.msk [vmem:[#allocation3 + $0x5] sm:$0x1] %vm218, %v567
    %v570 = vld [vmem:[#allocation2 + $0x6] sm:$0x1]
    %v571 = vld [vmem:[#allocation10] sm:$0xff]
    %v572 = vld [vmem:[#allocation10 + $0x8] sm:$0xff]
    %v573 = vld [vmem:[#allocation10 + $0x10] sm:$0xff]
    %v574 = vld [vmem:[#allocation10 + $0x18] sm:$0xff]
    %v575 = vsel %vm147, %v567, 0
    %577 = vmatpush.msra.mxu0 0.0
    %578 = vmatpush.msra.mxu0 0.0
    %579 = vmatpush.msra.mxu0 0.0
    %580 = vmatpush.msra.mxu0 0.0
    %581 = vmatpush.msra.mxu0 0.0
    %582 = vmatpush.msra.mxu0 0.0
    %583 = vmatpush.msra.mxu0 0.0
    %584 = vmatpush.msra.mxu0 0.0
    %585 = vmatpush.msra.mxu0 0.0
    %586 = vmatpush.msra.mxu0 0.0
    %587 = vmatpush.msra.mxu0 0.0
    %588 = vmatpush.msra.mxu0 0.0
    %589 = vmatpush.msra.mxu0 %v574
    %590 = vmatpush.msra.mxu0 %v573
    %591 = vmatpush.msra.mxu0 %v572
    %592 = vmatpush.msra.mxu0 %v571
    %593 = vmatmul.f32.gmra.mxu0 %v575
    %v594 = vpop.f32.mrf.mxu0
    %v595 = vadd.f32 0.0, %v594
    %596 = vdwg.mxu0
    %v597 = vadd.f32 %v570, %v595
    %v598 = vxor.u32 %v597, 2147483648
    %v599 = vmul.f32 %v598, 1.442695
    %v600 = vpow.pop %v599
    %v601 = vadd.f32 %v600, 1.0
    %v602 = vrcp.pop %v601
    %v603 = vmul.f32 %v601, %v602
    %v604 = vsub.f32 1.0, %v603
    %v605 = vmul.f32 %v602, %v604
    %v606 = vadd.f32 %v602, %v605
    %vm607 = vweird.f32 %v601
    %vm608 = vweird.f32 %v602
    %vm609 = vmor %vm607, %vm608
    %v610 = vsel %vm609, %v602, %v606
    %v611 = vand.u32 2147483647, %v601
    %vm612 = vcmp.eq.f32.partialorder %v611, 8.507059e+37
    %v613 = vand.u32 %v601, 2147483648
    %v614 = vor.u32 1.1754944e-38, %v613
    %v615 = vsel %vm612, %v614, %v610
    %v616 = vmul.f32 1.0, %v615
    %v617 = vtanh.pop %v597
    %v618 = vmul.f32 %v616, %v558
    %620 = vrot.lane.b32.xlu0 %v617, 64
    %v621 = vpop.permute.xlu0 %620
    %v623 = vmul.f32 %v616, %v621
    %625 = vrot.lane.b32.xlu0 %v623, 32
    %v626 = vpop.permute.xlu0 %625
    %v628 = vadd.f32 %v618, %v626
    %v629 = vtanh.pop %v628
    %631 = vrot.lane.b32.xlu0 %v629, 64
    %v632 = vpop.permute.xlu0 %631
    %v634 = vmul.f32 %v616, %v632
    %636 = vrot.lane.b32.xlu0 %v634, 32
    %v637 = vpop.permute.xlu0 %636
    %639 = vst.msk [vmem:[#allocation3 + $0x6] sm:$0x1] %vm218, %v637
    %v640 = vld [vmem:[#allocation2 + $0x7] sm:$0x1]
    %v641 = vld [vmem:[#allocation10] sm:$0xff]
    %v642 = vld [vmem:[#allocation10 + $0x8] sm:$0xff]
    %v643 = vld [vmem:[#allocation10 + $0x10] sm:$0xff]
    %v644 = vld [vmem:[#allocation10 + $0x18] sm:$0xff]
    %v645 = vsel %vm147, %v637, 0
    %647 = vmatpush.msra.mxu0 0.0
    %648 = vmatpush.msra.mxu0 0.0
    %649 = vmatpush.msra.mxu0 0.0
    %650 = vmatpush.msra.mxu0 0.0
    %651 = vmatpush.msra.mxu0 0.0
    %652 = vmatpush.msra.mxu0 0.0
    %653 = vmatpush.msra.mxu0 0.0
    %654 = vmatpush.msra.mxu0 0.0
    %655 = vmatpush.msra.mxu0 0.0
    %656 = vmatpush.msra.mxu0 0.0
    %657 = vmatpush.msra.mxu0 0.0
    %658 = vmatpush.msra.mxu0 0.0
    %659 = vmatpush.msra.mxu0 %v644
    %660 = vmatpush.msra.mxu0 %v643
    %661 = vmatpush.msra.mxu0 %v642
    %662 = vmatpush.msra.mxu0 %v641
    %663 = vmatmul.f32.gmra.mxu0 %v645
    %v664 = vpop.f32.mrf.mxu0
    %v665 = vadd.f32 0.0, %v664
    %666 = vdwg.mxu0
    %v667 = vadd.f32 %v640, %v665
    %v668 = vxor.u32 %v667, 2147483648
    %v669 = vmul.f32 %v668, 1.442695
    %v670 = vpow.pop %v669
    %v671 = vadd.f32 %v670, 1.0
    %v672 = vrcp.pop %v671
    %v673 = vmul.f32 %v671, %v672
    %v674 = vsub.f32 1.0, %v673
    %v675 = vmul.f32 %v672, %v674
    %v676 = vadd.f32 %v672, %v675
    %vm677 = vweird.f32 %v671
    %vm678 = vweird.f32 %v672
    %vm679 = vmor %vm677, %vm678
    %v680 = vsel %vm679, %v672, %v676
    %v681 = vand.u32 2147483647, %v671
    %vm682 = vcmp.eq.f32.partialorder %v681, 8.507059e+37
    %v683 = vand.u32 %v671, 2147483648
    %v684 = vor.u32 1.1754944e-38, %v683
    %v685 = vsel %vm682, %v684, %v680
    %v686 = vmul.f32 1.0, %v685
    %v687 = vtanh.pop %v667
    %v688 = vmul.f32 %v686, %v628
    %690 = vrot.lane.b32.xlu0 %v687, 64
    %v691 = vpop.permute.xlu0 %690
    %v693 = vmul.f32 %v686, %v691
    %695 = vrot.lane.b32.xlu0 %v693, 32
    %v696 = vpop.permute.xlu0 %695
    %v698 = vadd.f32 %v688, %v696
    %v699 = vtanh.pop %v698
    %701 = vrot.lane.b32.xlu0 %v699, 64
    %v702 = vpop.permute.xlu0 %701
    %v704 = vmul.f32 %v686, %v702
    %706 = vrot.lane.b32.xlu0 %v704, 32
    %v707 = vpop.permute.xlu0 %706
    %709 = vst.msk [vmem:[#allocation3 + $0x7] sm:$0x1] %vm218, %v707
    %710 = vst.msk [vmem:[#allocation14] sm:$0x1] %vm218, %v707
    %712 = vrot.lane.b32.xlu0 %v698, 96
    %v713 = vpop.permute.xlu0 %712
    %715 = vst.msk [vmem:[#allocation16] sm:$0x1] %vm218, %v713
    %v716 = vld [vmem:[#allocation3] sm:$0xff]
    %v717 = vld [vmem:[#allocation12] sm:$0xff]
    %v718 = vld [vmem:[#allocation12 + $0x8] sm:$0xff]
    %v719 = vld [vmem:[#allocation12 + $0x10] sm:$0xff]
    %v720 = vld [vmem:[#allocation12 + $0x18] sm:$0xff]
    %v721 = vld [vmem:[%s7] sm:$0x1]
    %v723 = vperm.slane %v721, 0
    %v726 = vsel %vm147, %v716, 0
    %728 = vmatpush.msra.mxu0 0.0
    %729 = vmatpush.msra.mxu0 0.0
    %730 = vmatpush.msra.mxu0 0.0
    %731 = vmatpush.msra.mxu0 0.0
    %732 = vmatpush.msra.mxu0 0.0
    %733 = vmatpush.msra.mxu0 0.0
    %734 = vmatpush.msra.mxu0 0.0
    %735 = vmatpush.msra.mxu0 0.0
    %736 = vmatpush.msra.mxu0 0.0
    %737 = vmatpush.msra.mxu0 0.0
    %738 = vmatpush.msra.mxu0 0.0
    %739 = vmatpush.msra.mxu0 0.0
    %740 = vmatpush.msra.mxu0 %v720
    %741 = vmatpush.msra.mxu0 %v719
    %742 = vmatpush.msra.mxu0 %v718
    %743 = vmatpush.msra.mxu0 %v717
    %744 = vmatmul.f32.gmra.mxu0 %v726
    %v745 = vpop.f32.mrf.mxu0
    %v746 = vadd.f32 %v723, %v745
    %747 = vdwg.mxu0
    %748 = vmax.xlane.f32.xlu0 %v746
    %v749 = vpop.xlane.xlu0 %748
    %v750 = vsub.f32 %v746, %v749
    %v751 = vmul.f32 %v750, 1.442695
    %v752 = vpow.pop %v751
    %753 = vadd.xlane.f32.xlu0 %v752
    %v754 = vpop.xlane.xlu0 %753
    %v755 = vlog2.pop %v754
    %v756 = vmul.f32 %v755, 0.6931472
    %v757 = vadd.f32 %v749, %v756
    %v758 = vsub.f32 %v746, %v757
    %759 = vst [vmem:[#allocation13] sm:$0xff] %v758
    // Predicated region
    $region54: #{tpu_custom_call.1} parent=1 // pred_check
      _
    $region55: #{tpu_custom_call.1} parent=1 // pred_check_branch
      %761 = sbr.rel (0) target = $region57
    $region56: #{tpu_custom_call.1} parent=1 // pred_region
      %763 = vsyncadd [#allocation6], 0
      %s765 = sshll.u32 [#allocation13], 4
      %s766 = int_to_ptr.vmem [resolvable:$true] %s765
      %s767 = sshll.u32 %s8, 4
      %s768 = int_to_ptr.hbm [resolvable:$true] %s767
      %770 = dma.vmem_to_hbm [thread:$0]  %s766, 128, %s768, [#allocation6]
    $region57: #{tpu_custom_call.1} parent=1 // pred_fallthru
      _
    // Predicated region
    $region58: #{tpu_custom_call.1} parent=1 // pred_check
      _
    $region59: #{tpu_custom_call.1} parent=1 // pred_check_branch
      %772 = sbr.rel (0) target = $region61
    $region60: #{tpu_custom_call.1} parent=1 // pred_region
      %774 = vsyncadd [#allocation15], 0
      %s776 = sshll.u32 [#allocation14], 4
      %s777 = int_to_ptr.vmem [resolvable:$true] %s776
      %s778 = sshll.u32 %s9, 4
      %s779 = int_to_ptr.hbm [resolvable:$true] %s778
      %781 = dma.vmem_to_hbm [thread:$0]  %s777, 16, %s779, [#allocation15]
    $region61: #{tpu_custom_call.1} parent=1 // pred_fallthru
      _
    // Predicated region
    $region62: #{tpu_custom_call.1} parent=1 // pred_check
      _
    $region63: #{tpu_custom_call.1} parent=1 // pred_check_branch
      %783 = sbr.rel (0) target = $region65
    $region64: #{tpu_custom_call.1} parent=1 // pred_region
      %785 = vsyncadd [#allocation15], 0
      %s787 = sshll.u32 [#allocation16], 4
      %s788 = int_to_ptr.vmem [resolvable:$true] %s787
      %s789 = sshll.u32 %s10, 4
      %s790 = int_to_ptr.hbm [resolvable:$true] %s789
      %792 = dma.vmem_to_hbm [thread:$0]  %s788, 16, %s790, [#allocation15]
    $region65: #{tpu_custom_call.1} parent=1 // pred_fallthru
      _
    // Predicated region
    $region66: #{tpu_custom_call.1} parent=1 // pred_check
      _
    $region67: #{tpu_custom_call.1} parent=1 // pred_check_branch
      %794 = sbr.rel (0) target = $region69
    $region68: #{tpu_custom_call.1} parent=1 // pred_region
      %796 = dma.done [#allocation6], 128
    $region69: #{tpu_custom_call.1} parent=1 // pred_fallthru
      _
    // Predicated region
    $region70: #{tpu_custom_call.1} parent=1 // pred_check
      _
    $region71: #{tpu_custom_call.1} parent=1 // pred_check_branch
      %798 = sbr.rel (0) target = $region73
    $region72: #{tpu_custom_call.1} parent=1 // pred_region
      %800 = dma.done [#allocation15], 16
    $region73: #{tpu_custom_call.1} parent=1 // pred_fallthru
      _
    // Predicated region
    $region74: #{tpu_custom_call.1} parent=1 // pred_check
      _
    $region75: #{tpu_custom_call.1} parent=1 // pred_check_branch
      %802 = sbr.rel (0) target = $region77
    $region76: #{tpu_custom_call.1} parent=1 // pred_region
      %804 = dma.done [#allocation15], 16
    $region77: #{tpu_custom_call.1} parent=1 // pred_fallthru
      _
    %805 = vsyncpa [#allocation5], 1
    %806 = vsyncpa [#allocation8], 1
    %807 = vsyncpa [#allocation11], 1
    %808 = vsyncpa [#allocation6], 1
    %809 = vsyncpa [#allocation15], 1

</llo_original>
